<compile_context>
chip_gen: v6e
topology: v6e:2x2x1
jax: 0.10.0
libtpu: 0.0.40
codegen_flags: <defaults>
</compile_context>

<pallas_src>
import numpy as np

import jax
import jax.numpy as jnp
from jax.experimental import pallas as pl
from jax.experimental.pallas import tpu as pltpu


_LANE = 128
_SUBLANE = 8
_MAX_BLOCK_BYTES = 4 * 1024 * 1024        # target ~4 MiB row tiles
_SMALL_INPUT_BYTES = 1 * 1024 * 1024      # below this, skip pallas entirely


# ----------------------------- kernel --------------------------------------


def relu_kernel(x_ref, o_ref):
    o_ref[...] = jnp.maximum(x_ref[...], jnp.asarray(0, x_ref.dtype))


# ----------------------------- pallas wrapper -------------------------------


@jax.jit
def _relu_pallas(x):
    """ReLU over an arbitrary-shape array via a lane-dense (rows, 128) view."""
    shape = x.shape
    dtype = x.dtype
    itemsize = jnp.dtype(dtype).itemsize
    total = int(np.prod(shape))

    flat = x.reshape(-1)
    pad = (-total) % _LANE
    if pad:  # rare: NCHW feature maps are normally 128-divisible
        flat = jnp.pad(flat, (0, pad))
    rows = (total + pad) // _LANE
    x2d = flat.reshape(rows, _LANE)

    # Row tile: ~4 MiB blocks, always a multiple of 8 sublanes, and always
    # >= 2 grid steps so the parallel axis can split across v7x's two TCs.
    max_tile_rows = max(
        _SUBLANE,
        (_MAX_BLOCK_BYTES // (_LANE * itemsize)) // _SUBLANE * _SUBLANE,
    )
    half_rows = -(-rows // 2)
    half_rows = -(-half_rows // _SUBLANE) * _SUBLANE
    tile_rows = min(max_tile_rows, half_rows)

    block_bytes = tile_rows * _LANE * itemsize
    # in + out, double-buffered = 4 blocks; add headroom, cap at 32 MiB
    # (inside scoped/physical VMEM on v5e, v6e and v7x).
    vmem_limit = min(32 * 1024 * 1024,
                     max(16 * 1024 * 1024, 4 * block_bytes + (4 << 20)))

    y2d = pl.pallas_call(
        relu_kernel,
        out_shape=jax.ShapeDtypeStruct((rows, _LANE), dtype),
        grid=(pl.cdiv(rows, tile_rows),),
        in_specs=[pl.BlockSpec((tile_rows, _LANE), lambda i: (i, 0))],
        out_specs=pl.BlockSpec((tile_rows, _LANE), lambda i: (i, 0)),
        compiler_params=pltpu.CompilerParams(
            dimension_semantics=("parallel",),
            vmem_limit_bytes=int(vmem_limit),
        ),
        # NOTE: input_output_aliases={0: 0} would let the ReLU write in place,
        # but only pays off when the caller donates x; left off so x stays
        # valid for callers that still need it.
    )(x2d)

    if pad:
        return y2d.reshape(-1)[:total].reshape(shape)
    return y2d.reshape(shape)


# ----------------------------- module forward ------------------------------


def chained_residual_pool(x_nchw, weights=None):
    """Forward of RefineNet ChainedResidualPool.

    `weights` (the three 3x3 conv filters) is accepted for API parity with the
    PyTorch module but unused: the module's forward returns relu(x) — the
    maxpool+conv block outputs are assigned to `res_x` and discarded, so they
    are dead code and removed here.
    """
    del weights  # dead code in the reference forward
    total_bytes = int(np.prod(x_nchw.shape)) * jnp.dtype(x_nchw.dtype).itemsize
    if total_bytes < _SMALL_INPUT_BYTES:
        # Tiny activations: pallas_call launch overhead dominates — use a
        # plain XLA elementwise max instead.
        return jnp.maximum(x_nchw, jnp.asarray(0, x_nchw.dtype))
    return _relu_pallas(x_nchw)


# ----------------------------- main ----------------------------------------

if __name__ == "__main__":
    key = jax.random.PRNGKey(0)
    kx, kbig, k1, k2, k3 = jax.random.split(key, 5)

    # Module-scale input (feats=4): hits the small-input fast path.
    N, C, H, W = 2, 4, 16, 16
    x_small = jax.random.normal(kx, (N, C, H, W), dtype=jnp.float32)

    # Conv weights (HWIO, bias=False) — present in the module but dead in its
    # forward pass; constructed only for API parity.
    std = (2.0 / (C * 9)) ** 0.5
    weights = [jax.random.normal(k, (3, 3, C, C), dtype=jnp.float32) * std
               for k in (k1, k2, k3)]

    out_small = jax.block_until_ready(chained_residual_pool(x_small, weights))
    np.testing.assert_allclose(np.asarray(out_small),
                               np.maximum(np.asarray(x_small), 0.0),
                               rtol=0, atol=0)

    # Larger activation (2 MiB) to exercise the Pallas kernel path:
    # rows = 4096 -> two 2048-row (1 MiB) tiles on the parallel grid axis.
    x_big = jax.random.normal(kbig, (4, 32, 64, 64), dtype=jnp.float32)
    out_big = jax.block_until_ready(chained_residual_pool(x_big))
    np.testing.assert_allclose(np.asarray(out_big),
                               np.maximum(np.asarray(x_big), 0.0),
                               rtol=0, atol=0)

    print("KERNEL_OK")
</pallas_src>

<mosaic_0001>
module attributes {stable_mosaic.version = 11 : i64} {
  func.func @relu_kernel(%arg0: i32, %arg1: memref<2048x128xf32, #tpu.memory_space<vmem>>, %arg2: memref<2048x128xf32, #tpu.memory_space<vmem>>) attributes {dimension_semantics = [#tpu.dimension_semantics<parallel>], iteration_bounds = array<i64: 2>, scalar_prefetch = 0 : i64, scratch_operands = 0 : i64, tpu.core_type = #tpu.core_type<tc>, window_params = [{transform_indices = @transform_0, window_bounds = array<i64: 2048, 128>}, {transform_indices = @transform_1, window_bounds = array<i64: 2048, 128>}]} {
    %c0 = arith.constant 0 : index
    %c0_0 = arith.constant 0 : index
    %0 = vector.load %arg1[%c0, %c0_0] : memref<2048x128xf32, #tpu.memory_space<vmem>>, vector<2048x128xf32>
    %cst = arith.constant 0.000000e+00 : f32
    %1 = vector.broadcast %cst : f32 to vector<2048x128xf32>
    %2 = arith.maximumf %0, %1 : vector<2048x128xf32>
    %c0_1 = arith.constant 0 : index
    %c0_2 = arith.constant 0 : index
    %3 = vector.load %arg2[%c0_1, %c0_2] : memref<2048x128xf32, #tpu.memory_space<vmem>>, vector<2048x128xf32>
    tpu.vector_store %arg2[%c0_1, %c0_2], %2 {strides = array<i32>} : memref<2048x128xf32, #tpu.memory_space<vmem>>, vector<2048x128xf32>,
    return
  }
  func.func @transform_0(%arg0: i32) -> (i32, i32) {
    %c0_i32 = arith.constant 0 : i32
    %c0_i32_0 = arith.constant 0 : i32
    return %arg0, %c0_i32 : i32, i32
  }
  func.func @transform_1(%arg0: i32) -> (i32, i32) {
    %c0_i32 = arith.constant 0 : i32
    %c0_i32_0 = arith.constant 0 : i32
    return %arg0, %c0_i32 : i32, i32
  }
}

</mosaic_0001>

<llo_original>
// kernel: _relu_pallas.1
$region0: #{_relu_pallas.1}
  #allocation0 [shape = 'u32[]', space=smem, size = 0x4, offset = 0x4, fixed_abs, tag = 'smem constant byte address 0x4 - core index']
  #allocation1 [shape = 'u32[144,128]{1,0:T(1,128)}', space=vmem, size = 0x12000, scoped, tag = 'internal scratch']
  %s0 = inlined_call_operand.vmem [shape: f32[4096,128], index: 0, kind: input, shape index: {}]
  %s1 = inlined_call_operand.vmem [shape: f32[4096,128], index: 1, kind: output, shape index: {}]
  %s2 = sld [smem:[#allocation0]]
  $region37: #{_relu_pallas.1} parent=0
    _
  %s4 = ssub.s32 1, %s2
  %s5 = scalar_select 0, %s4, %s2
  loop: start=0, step=1, limit=4
  $region2: #{_relu_pallas.1} parent=0 // loop_pre_header
    _
  $region3: #{_relu_pallas.1} parent=0 // loop_header
    %s7 = sphi 0, %s11
    %p8 = scmp.ge.s32.totalorder %s7, 4
    %s17 = sphi 0, %s19
    %s20 = sphi 0, %s17
    %s21 = sphi 0, %s20
    %s37 = sphi 0, %s21
    %s43 = sphi 0, %s45
    %s46 = sphi 0, %s43
    %s47 = sphi 0, %s46
    %s63 = sphi 0, %s47
  $region4: #{_relu_pallas.1} parent=0 // loop_header_branch
    %10 = sbr.rel (%p8) target = $region8
  $region5: #{_relu_pallas.1} parent=0 // loop_body
    %s12 = ssub.s32 %s7, 1
    %s13 = ssub.s32 %s7, 2
    %s14 = sadd.s32 %s7, 1
    %s15 = ssub.s32 %s7, %s14
    %p16 = scmp.eq.s32.totalorder %s15, 0
    %s18 = sadd.s32 %s17, 1
    %s19 = scalar_select %p16, %s17, %s18
    %p22 = pneg %p16
    %p23 = scmp.eq.s32.totalorder %s7, 1
    %p24 = por %p22, %p23
    %p25 = scmp.ne.s32.totalorder %s17, %s20
    %p26 = scmp.eq.s32.totalorder %s7, 0
    %p27 = por %p25, %p26
    %p28 = scmp.ne.s32.totalorder %s17, %s20
    %p29 = scmp.eq.s32.totalorder %s12, 1
    %p30 = por %p28, %p29
    %p31 = scmp.ne.s32.totalorder %s20, %s21
    %p32 = scmp.eq.s32.totalorder %s12, 0
    %p33 = por %p31, %p32
    %p34 = scmp.ne.s32.totalorder %s20, %s21
    %p35 = scmp.eq.s32.totalorder %s13, 1
    %p36 = por %p34, %p35
    %p38 = scmp.ne.s32.totalorder %s21, %s37
    %p39 = scmp.eq.s32.totalorder %s13, 0
    %p40 = por %p38, %p39
    %s41 = ssub.s32 %s7, %s14
    %p42 = scmp.eq.s32.totalorder %s41, 0
    %s44 = sadd.s32 %s43, 1
    %s45 = scalar_select %p42, %s43, %s44
    %p48 = pneg %p42
    %p49 = scmp.eq.s32.totalorder %s7, 1
    %p50 = por %p48, %p49
    %p51 = scmp.ne.s32.totalorder %s43, %s46
    %p52 = scmp.eq.s32.totalorder %s7, 0
    %p53 = por %p51, %p52
    %p54 = scmp.ne.s32.totalorder %s43, %s46
    %p55 = scmp.eq.s32.totalorder %s12, 1
    %p56 = por %p54, %p55
    %p57 = scmp.ne.s32.totalorder %s46, %s47
    %p58 = scmp.eq.s32.totalorder %s12, 0
    %p59 = por %p57, %p58
    %p60 = scmp.ne.s32.totalorder %s46, %s47
    %p61 = scmp.eq.s32.totalorder %s13, 1
    %p62 = por %p60, %p61
    %p64 = scmp.ne.s32.totalorder %s47, %s63
    %p65 = scmp.eq.s32.totalorder %s13, 0
    %p66 = por %p64, %p65
    %p67 = scmp.le.s32.totalorder 1, %s7
    %p68 = scmp.lt.s32.totalorder %s7, 3
    %p69 = pnand %p67, %p68
    %p70 = pneg %p69
    // Predicated region
    $region9: #{_relu_pallas.1} parent=5 // pred_check
      _
    $region10: #{_relu_pallas.1} parent=5 // pred_check_branch
      %72 = sbr.rel (%p69) target = $region12
    $region11: #{_relu_pallas.1} parent=5 // pred_region
      %s73 = ssub.s32 %s7, 1
    $region12: #{_relu_pallas.1} parent=5 // pred_fallthru
      _
    %p74 = scmp.lt.s32.totalorder %s7, 2
    // Predicated region
    $region13: #{_relu_pallas.1} parent=5 // pred_check
      %p75 = pneg %p74
    $region14: #{_relu_pallas.1} parent=5 // pred_check_branch
      %77 = sbr.rel (%p75) target = $region16
    $region15: #{_relu_pallas.1} parent=5 // pred_region
      // Predicated region
      $region17: #{_relu_pallas.1} parent=15 // pred_check
        %p78 = pneg %p27
      $region18: #{_relu_pallas.1} parent=15 // pred_check_branch
        %80 = sbr.rel (%p78) target = $region20
      $region19: #{_relu_pallas.1} parent=15 // pred_region
        %s81 = smul.u32 256, %s7
        %p82 = scmp.lt.s32.totalorder %s81, 511
        %s83 = scalar_select %p82, %s81, 511
        %s84 = smul.addr %s83, 8
        %s85 = scalar_lea.vmem %s0, %s84
        %s86 = smul.u32 256, %s7
      $region20: #{_relu_pallas.1} parent=15 // pred_fallthru
        _
    $region16: #{_relu_pallas.1} parent=5 // pred_fallthru
      _
    %p87 = scmp.le.s32.totalorder 1, %s7
    %p88 = scmp.lt.s32.totalorder %s7, 3
    %p89 = pnand %p87, %p88
    %p90 = pneg %p89
    // Predicated region
    $region21: #{_relu_pallas.1} parent=5 // pred_check
      _
    $region22: #{_relu_pallas.1} parent=5 // pred_check_branch
      %92 = sbr.rel (%p89) target = $region24
    $region23: #{_relu_pallas.1} parent=5 // pred_region
      %s93 = ssub.s32 %s7, 1
      %s94 = smul.u32 256, %s12
      %p95 = scmp.lt.s32.totalorder %s94, 511
      %s96 = scalar_select %p95, %s94, 511
      %s97 = smul.addr %s96, 8
      %s98 = scalar_lea.vmem %s0, %s97
      %p99 = pneg %p33
      %p100 = pneg %p30
      %p101 = pneg %p59
      %p102 = pneg %p56
      %s103 = smul.u32 256, %s12
      %p104 = scmp.lt.s32.totalorder %s103, 511
      %s105 = scalar_select %p104, %s103, 511
      %s106 = smul.addr %s105, 8
      %s107 = scalar_lea.vmem %s1, %s106
      %s108 = smul.u32 256, %s12
      %p109 = scmp.lt.s32.totalorder %s108, 511
      %s110 = scalar_select %p109, %s108, 511
      %s111 = smul.addr %s110, 8
      %s112 = scalar_lea.vmem %s0, %s111
      %s113 = smul.u32 256, %s12
      %s114 = smul.u32 256, %s12
      %p115 = scmp.lt.s32.totalorder %s114, 511
      %s116 = scalar_select %p115, %s114, 511
      %s117 = smul.addr %s116, 8
      %s118 = scalar_lea.vmem %s1, %s117
      %s119 = smul.u32 256, %s12
      %v120 = vld [vmem:[%s112] sm:$0xff]
      %v121 = vld [vmem:[%s112 + $0x8] sm:$0xff]
      %v122 = vld [vmem:[%s112 + $0x10] sm:$0xff]
      %v123 = vld [vmem:[%s112 + $0x18] sm:$0xff]
      %v124 = vld [vmem:[%s112 + $0x20] sm:$0xff]
      %v125 = vld [vmem:[%s112 + $0x28] sm:$0xff]
      %v126 = vld [vmem:[%s112 + $0x30] sm:$0xff]
      %v127 = vld [vmem:[%s112 + $0x38] sm:$0xff]
      %v128 = vld [vmem:[%s112 + $0x40] sm:$0xff]
      %v129 = vld [vmem:[%s112 + $0x48] sm:$0xff]
      %v130 = vld [vmem:[%s112 + $0x50] sm:$0xff]
      %v131 = vld [vmem:[%s112 + $0x58] sm:$0xff]
      %v132 = vld [vmem:[%s112 + $0x60] sm:$0xff]
      %v133 = vld [vmem:[%s112 + $0x68] sm:$0xff]
      %v134 = vld [vmem:[%s112 + $0x70] sm:$0xff]
      %v135 = vld [vmem:[%s112 + $0x78] sm:$0xff]
      %v136 = vld [vmem:[%s112 + $0x80] sm:$0xff]
      %v137 = vld [vmem:[%s112 + $0x88] sm:$0xff]
      %v138 = vld [vmem:[%s112 + $0x90] sm:$0xff]
      %v139 = vld [vmem:[%s112 + $0x98] sm:$0xff]
      %v140 = vld [vmem:[%s112 + $0xa0] sm:$0xff]
      %v141 = vld [vmem:[%s112 + $0xa8] sm:$0xff]
      %v142 = vld [vmem:[%s112 + $0xb0] sm:$0xff]
      %v143 = vld [vmem:[%s112 + $0xb8] sm:$0xff]
      %v144 = vld [vmem:[%s112 + $0xc0] sm:$0xff]
      %v145 = vld [vmem:[%s112 + $0xc8] sm:$0xff]
      %v146 = vld [vmem:[%s112 + $0xd0] sm:$0xff]
      %v147 = vld [vmem:[%s112 + $0xd8] sm:$0xff]
      %v148 = vld [vmem:[%s112 + $0xe0] sm:$0xff]
      %v149 = vld [vmem:[%s112 + $0xe8] sm:$0xff]
      %v150 = vld [vmem:[%s112 + $0xf0] sm:$0xff]
      %v151 = vld [vmem:[%s112 + $0xf8] sm:$0xff]
      %v152 = vld [vmem:[%s112 + $0x100] sm:$0xff]
      %v153 = vld [vmem:[%s112 + $0x108] sm:$0xff]
      %v154 = vld [vmem:[%s112 + $0x110] sm:$0xff]
      %v155 = vld [vmem:[%s112 + $0x118] sm:$0xff]
      %v156 = vld [vmem:[%s112 + $0x120] sm:$0xff]
      %v157 = vld [vmem:[%s112 + $0x128] sm:$0xff]
      %v158 = vld [vmem:[%s112 + $0x130] sm:$0xff]
      %v159 = vld [vmem:[%s112 + $0x138] sm:$0xff]
      %v160 = vld [vmem:[%s112 + $0x140] sm:$0xff]
      %v161 = vld [vmem:[%s112 + $0x148] sm:$0xff]
      %v162 = vld [vmem:[%s112 + $0x150] sm:$0xff]
      %v163 = vld [vmem:[%s112 + $0x158] sm:$0xff]
      %v164 = vld [vmem:[%s112 + $0x160] sm:$0xff]
      %v165 = vld [vmem:[%s112 + $0x168] sm:$0xff]
      %v166 = vld [vmem:[%s112 + $0x170] sm:$0xff]
      %v167 = vld [vmem:[%s112 + $0x178] sm:$0xff]
      %v168 = vld [vmem:[%s112 + $0x180] sm:$0xff]
      %v169 = vld [vmem:[%s112 + $0x188] sm:$0xff]
      %v170 = vld [vmem:[%s112 + $0x190] sm:$0xff]
      %v171 = vld [vmem:[%s112 + $0x198] sm:$0xff]
      %v172 = vld [vmem:[%s112 + $0x1a0] sm:$0xff]
      %v173 = vld [vmem:[%s112 + $0x1a8] sm:$0xff]
      %v174 = vld [vmem:[%s112 + $0x1b0] sm:$0xff]
      %v175 = vld [vmem:[%s112 + $0x1b8] sm:$0xff]
      %v176 = vld [vmem:[%s112 + $0x1c0] sm:$0xff]
      %v177 = vld [vmem:[%s112 + $0x1c8] sm:$0xff]
      %v178 = vld [vmem:[%s112 + $0x1d0] sm:$0xff]
      %v179 = vld [vmem:[%s112 + $0x1d8] sm:$0xff]
      %v180 = vld [vmem:[%s112 + $0x1e0] sm:$0xff]
      %v181 = vld [vmem:[%s112 + $0x1e8] sm:$0xff]
      %v182 = vld [vmem:[%s112 + $0x1f0] sm:$0xff]
      %v183 = vld [vmem:[%s112 + $0x1f8] sm:$0xff]
      %v184 = vld [vmem:[%s112 + $0x200] sm:$0xff]
      %v185 = vld [vmem:[%s112 + $0x208] sm:$0xff]
      %v186 = vld [vmem:[%s112 + $0x210] sm:$0xff]
      %v187 = vld [vmem:[%s112 + $0x218] sm:$0xff]
      %v188 = vld [vmem:[%s112 + $0x220] sm:$0xff]
      %v189 = vld [vmem:[%s112 + $0x228] sm:$0xff]
      %v190 = vld [vmem:[%s112 + $0x230] sm:$0xff]
      %v191 = vld [vmem:[%s112 + $0x238] sm:$0xff]
      %v192 = vld [vmem:[%s112 + $0x240] sm:$0xff]
      %v193 = vld [vmem:[%s112 + $0x248] sm:$0xff]
      %v194 = vld [vmem:[%s112 + $0x250] sm:$0xff]
      %v195 = vld [vmem:[%s112 + $0x258] sm:$0xff]
      %v196 = vld [vmem:[%s112 + $0x260] sm:$0xff]
      %v197 = vld [vmem:[%s112 + $0x268] sm:$0xff]
      %v198 = vld [vmem:[%s112 + $0x270] sm:$0xff]
      %v199 = vld [vmem:[%s112 + $0x278] sm:$0xff]
      %v200 = vld [vmem:[%s112 + $0x280] sm:$0xff]
      %v201 = vld [vmem:[%s112 + $0x288] sm:$0xff]
      %v202 = vld [vmem:[%s112 + $0x290] sm:$0xff]
      %v203 = vld [vmem:[%s112 + $0x298] sm:$0xff]
      %v204 = vld [vmem:[%s112 + $0x2a0] sm:$0xff]
      %v205 = vld [vmem:[%s112 + $0x2a8] sm:$0xff]
      %v206 = vld [vmem:[%s112 + $0x2b0] sm:$0xff]
      %v207 = vld [vmem:[%s112 + $0x2b8] sm:$0xff]
      %v208 = vld [vmem:[%s112 + $0x2c0] sm:$0xff]
      %v209 = vld [vmem:[%s112 + $0x2c8] sm:$0xff]
      %v210 = vld [vmem:[%s112 + $0x2d0] sm:$0xff]
      %v211 = vld [vmem:[%s112 + $0x2d8] sm:$0xff]
      %v212 = vld [vmem:[%s112 + $0x2e0] sm:$0xff]
      %v213 = vld [vmem:[%s112 + $0x2e8] sm:$0xff]
      %v214 = vld [vmem:[%s112 + $0x2f0] sm:$0xff]
      %v215 = vld [vmem:[%s112 + $0x2f8] sm:$0xff]
      %v216 = vld [vmem:[%s112 + $0x300] sm:$0xff]
      %v217 = vld [vmem:[%s112 + $0x308] sm:$0xff]
      %v218 = vld [vmem:[%s112 + $0x310] sm:$0xff]
      %v219 = vld [vmem:[%s112 + $0x318] sm:$0xff]
      %v220 = vld [vmem:[%s112 + $0x320] sm:$0xff]
      %v221 = vld [vmem:[%s112 + $0x328] sm:$0xff]
      %v222 = vld [vmem:[%s112 + $0x330] sm:$0xff]
      %v223 = vld [vmem:[%s112 + $0x338] sm:$0xff]
      %v224 = vld [vmem:[%s112 + $0x340] sm:$0xff]
      %v225 = vld [vmem:[%s112 + $0x348] sm:$0xff]
      %v226 = vld [vmem:[%s112 + $0x350] sm:$0xff]
      %v227 = vld [vmem:[%s112 + $0x358] sm:$0xff]
      %v228 = vld [vmem:[%s112 + $0x360] sm:$0xff]
      %v229 = vld [vmem:[%s112 + $0x368] sm:$0xff]
      %v230 = vld [vmem:[%s112 + $0x370] sm:$0xff]
      %v231 = vld [vmem:[%s112 + $0x378] sm:$0xff]
      %v232 = vld [vmem:[%s112 + $0x380] sm:$0xff]
      %v233 = vld [vmem:[%s112 + $0x388] sm:$0xff]
      %v234 = vld [vmem:[%s112 + $0x390] sm:$0xff]
      %v235 = vld [vmem:[%s112 + $0x398] sm:$0xff]
      %v236 = vld [vmem:[%s112 + $0x3a0] sm:$0xff]
      %v237 = vld [vmem:[%s112 + $0x3a8] sm:$0xff]
      %v238 = vld [vmem:[%s112 + $0x3b0] sm:$0xff]
      %v239 = vld [vmem:[%s112 + $0x3b8] sm:$0xff]
      %v240 = vld [vmem:[%s112 + $0x3c0] sm:$0xff]
      %v241 = vld [vmem:[%s112 + $0x3c8] sm:$0xff]
      %v242 = vld [vmem:[%s112 + $0x3d0] sm:$0xff]
      %v243 = vld [vmem:[%s112 + $0x3d8] sm:$0xff]
      %v244 = vld [vmem:[%s112 + $0x3e0] sm:$0xff]
      %v245 = vld [vmem:[%s112 + $0x3e8] sm:$0xff]
      %v246 = vld [vmem:[%s112 + $0x3f0] sm:$0xff]
      %v247 = vld [vmem:[%s112 + $0x3f8] sm:$0xff]
      %v248 = vld [vmem:[%s112 + $0x400] sm:$0xff]
      %v249 = vld [vmem:[%s112 + $0x408] sm:$0xff]
      %v250 = vld [vmem:[%s112 + $0x410] sm:$0xff]
      %v251 = vld [vmem:[%s112 + $0x418] sm:$0xff]
      %v252 = vld [vmem:[%s112 + $0x420] sm:$0xff]
      %v253 = vld [vmem:[%s112 + $0x428] sm:$0xff]
      %v254 = vld [vmem:[%s112 + $0x430] sm:$0xff]
      %v255 = vld [vmem:[%s112 + $0x438] sm:$0xff]
      %v256 = vld [vmem:[%s112 + $0x440] sm:$0xff]
      %v257 = vld [vmem:[%s112 + $0x448] sm:$0xff]
      %v258 = vld [vmem:[%s112 + $0x450] sm:$0xff]
      %v259 = vld [vmem:[%s112 + $0x458] sm:$0xff]
      %v260 = vld [vmem:[%s112 + $0x460] sm:$0xff]
      %v261 = vld [vmem:[%s112 + $0x468] sm:$0xff]
      %v262 = vld [vmem:[%s112 + $0x470] sm:$0xff]
      %v263 = vld [vmem:[%s112 + $0x478] sm:$0xff]
      %v264 = vld [vmem:[%s112 + $0x480] sm:$0xff]
      %v265 = vld [vmem:[%s112 + $0x488] sm:$0xff]
      %v266 = vld [vmem:[%s112 + $0x490] sm:$0xff]
      %v267 = vld [vmem:[%s112 + $0x498] sm:$0xff]
      %v268 = vld [vmem:[%s112 + $0x4a0] sm:$0xff]
      %v269 = vld [vmem:[%s112 + $0x4a8] sm:$0xff]
      %v270 = vld [vmem:[%s112 + $0x4b0] sm:$0xff]
      %v271 = vld [vmem:[%s112 + $0x4b8] sm:$0xff]
      %v272 = vld [vmem:[%s112 + $0x4c0] sm:$0xff]
      %v273 = vld [vmem:[%s112 + $0x4c8] sm:$0xff]
      %v274 = vld [vmem:[%s112 + $0x4d0] sm:$0xff]
      %v275 = vld [vmem:[%s112 + $0x4d8] sm:$0xff]
      %v276 = vld [vmem:[%s112 + $0x4e0] sm:$0xff]
      %v277 = vld [vmem:[%s112 + $0x4e8] sm:$0xff]
      %v278 = vld [vmem:[%s112 + $0x4f0] sm:$0xff]
      %v279 = vld [vmem:[%s112 + $0x4f8] sm:$0xff]
      %v280 = vld [vmem:[%s112 + $0x500] sm:$0xff]
      %v281 = vld [vmem:[%s112 + $0x508] sm:$0xff]
      %v282 = vld [vmem:[%s112 + $0x510] sm:$0xff]
      %v283 = vld [vmem:[%s112 + $0x518] sm:$0xff]
      %v284 = vld [vmem:[%s112 + $0x520] sm:$0xff]
      %v285 = vld [vmem:[%s112 + $0x528] sm:$0xff]
      %v286 = vld [vmem:[%s112 + $0x530] sm:$0xff]
      %v287 = vld [vmem:[%s112 + $0x538] sm:$0xff]
      %v288 = vld [vmem:[%s112 + $0x540] sm:$0xff]
      %v289 = vld [vmem:[%s112 + $0x548] sm:$0xff]
      %v290 = vld [vmem:[%s112 + $0x550] sm:$0xff]
      %v291 = vld [vmem:[%s112 + $0x558] sm:$0xff]
      %v292 = vld [vmem:[%s112 + $0x560] sm:$0xff]
      %v293 = vld [vmem:[%s112 + $0x568] sm:$0xff]
      %v294 = vld [vmem:[%s112 + $0x570] sm:$0xff]
      %v295 = vld [vmem:[%s112 + $0x578] sm:$0xff]
      %v296 = vld [vmem:[%s112 + $0x580] sm:$0xff]
      %v297 = vld [vmem:[%s112 + $0x588] sm:$0xff]
      %v298 = vld [vmem:[%s112 + $0x590] sm:$0xff]
      %v299 = vld [vmem:[%s112 + $0x598] sm:$0xff]
      %v300 = vld [vmem:[%s112 + $0x5a0] sm:$0xff]
      %v301 = vld [vmem:[%s112 + $0x5a8] sm:$0xff]
      %v302 = vld [vmem:[%s112 + $0x5b0] sm:$0xff]
      %v303 = vld [vmem:[%s112 + $0x5b8] sm:$0xff]
      %v304 = vld [vmem:[%s112 + $0x5c0] sm:$0xff]
      %v305 = vld [vmem:[%s112 + $0x5c8] sm:$0xff]
      %v306 = vld [vmem:[%s112 + $0x5d0] sm:$0xff]
      %v307 = vld [vmem:[%s112 + $0x5d8] sm:$0xff]
      %v308 = vld [vmem:[%s112 + $0x5e0] sm:$0xff]
      %v309 = vld [vmem:[%s112 + $0x5e8] sm:$0xff]
      %v310 = vld [vmem:[%s112 + $0x5f0] sm:$0xff]
      %v311 = vld [vmem:[%s112 + $0x5f8] sm:$0xff]
      %v312 = vld [vmem:[%s112 + $0x600] sm:$0xff]
      %v313 = vld [vmem:[%s112 + $0x608] sm:$0xff]
      %v314 = vld [vmem:[%s112 + $0x610] sm:$0xff]
      %v315 = vld [vmem:[%s112 + $0x618] sm:$0xff]
      %v316 = vld [vmem:[%s112 + $0x620] sm:$0xff]
      %v317 = vld [vmem:[%s112 + $0x628] sm:$0xff]
      %v318 = vld [vmem:[%s112 + $0x630] sm:$0xff]
      %v319 = vld [vmem:[%s112 + $0x638] sm:$0xff]
      %v320 = vld [vmem:[%s112 + $0x640] sm:$0xff]
      %v321 = vld [vmem:[%s112 + $0x648] sm:$0xff]
      %v322 = vld [vmem:[%s112 + $0x650] sm:$0xff]
      %v323 = vld [vmem:[%s112 + $0x658] sm:$0xff]
      %v324 = vld [vmem:[%s112 + $0x660] sm:$0xff]
      %v325 = vld [vmem:[%s112 + $0x668] sm:$0xff]
      %v326 = vld [vmem:[%s112 + $0x670] sm:$0xff]
      %v327 = vld [vmem:[%s112 + $0x678] sm:$0xff]
      %v328 = vld [vmem:[%s112 + $0x680] sm:$0xff]
      %v329 = vld [vmem:[%s112 + $0x688] sm:$0xff]
      %v330 = vld [vmem:[%s112 + $0x690] sm:$0xff]
      %v331 = vld [vmem:[%s112 + $0x698] sm:$0xff]
      %v332 = vld [vmem:[%s112 + $0x6a0] sm:$0xff]
      %v333 = vld [vmem:[%s112 + $0x6a8] sm:$0xff]
      %v334 = vld [vmem:[%s112 + $0x6b0] sm:$0xff]
      %v335 = vld [vmem:[%s112 + $0x6b8] sm:$0xff]
      %v336 = vld [vmem:[%s112 + $0x6c0] sm:$0xff]
      %v337 = vld [vmem:[%s112 + $0x6c8] sm:$0xff]
      %v338 = vld [vmem:[%s112 + $0x6d0] sm:$0xff]
      %v339 = vld [vmem:[%s112 + $0x6d8] sm:$0xff]
      %v340 = vld [vmem:[%s112 + $0x6e0] sm:$0xff]
      %v341 = vld [vmem:[%s112 + $0x6e8] sm:$0xff]
      %v342 = vld [vmem:[%s112 + $0x6f0] sm:$0xff]
      %v343 = vld [vmem:[%s112 + $0x6f8] sm:$0xff]
      %v344 = vld [vmem:[%s112 + $0x700] sm:$0xff]
      %v345 = vld [vmem:[%s112 + $0x708] sm:$0xff]
      %v346 = vld [vmem:[%s112 + $0x710] sm:$0xff]
      %v347 = vld [vmem:[%s112 + $0x718] sm:$0xff]
      %v348 = vld [vmem:[%s112 + $0x720] sm:$0xff]
      %v349 = vld [vmem:[%s112 + $0x728] sm:$0xff]
      %v350 = vld [vmem:[%s112 + $0x730] sm:$0xff]
      %v351 = vld [vmem:[%s112 + $0x738] sm:$0xff]
      %v352 = vld [vmem:[%s112 + $0x740] sm:$0xff]
      %v353 = vld [vmem:[%s112 + $0x748] sm:$0xff]
      %v354 = vld [vmem:[%s112 + $0x750] sm:$0xff]
      %v355 = vld [vmem:[%s112 + $0x758] sm:$0xff]
      %v356 = vld [vmem:[%s112 + $0x760] sm:$0xff]
      %v357 = vld [vmem:[%s112 + $0x768] sm:$0xff]
      %v358 = vld [vmem:[%s112 + $0x770] sm:$0xff]
      %v359 = vld [vmem:[%s112 + $0x778] sm:$0xff]
      %v360 = vld [vmem:[%s112 + $0x780] sm:$0xff]
      %v361 = vld [vmem:[%s112 + $0x788] sm:$0xff]
      %v362 = vld [vmem:[%s112 + $0x790] sm:$0xff]
      %v363 = vld [vmem:[%s112 + $0x798] sm:$0xff]
      %v364 = vld [vmem:[%s112 + $0x7a0] sm:$0xff]
      %v365 = vld [vmem:[%s112 + $0x7a8] sm:$0xff]
      %v366 = vld [vmem:[%s112 + $0x7b0] sm:$0xff]
      %v367 = vld [vmem:[%s112 + $0x7b8] sm:$0xff]
      %v368 = vld [vmem:[%s112 + $0x7c0] sm:$0xff]
      %v369 = vld [vmem:[%s112 + $0x7c8] sm:$0xff]
      %v370 = vld [vmem:[%s112 + $0x7d0] sm:$0xff]
      %v371 = vld [vmem:[%s112 + $0x7d8] sm:$0xff]
      %v372 = vld [vmem:[%s112 + $0x7e0] sm:$0xff]
      %v373 = vld [vmem:[%s112 + $0x7e8] sm:$0xff]
      %v374 = vld [vmem:[%s112 + $0x7f0] sm:$0xff]
      %v375 = vld [vmem:[%s112 + $0x7f8] sm:$0xff]
      %v376 = vmax.f32 %v120, 0.0
      %v377 = vmax.f32 %v121, 0.0
      %v378 = vmax.f32 %v122, 0.0
      %v379 = vmax.f32 %v123, 0.0
      %v380 = vmax.f32 %v124, 0.0
      %v381 = vmax.f32 %v125, 0.0
      %v382 = vmax.f32 %v126, 0.0
      %v383 = vmax.f32 %v127, 0.0
      %v384 = vmax.f32 %v128, 0.0
      %v385 = vmax.f32 %v129, 0.0
      %v386 = vmax.f32 %v130, 0.0
      %v387 = vmax.f32 %v131, 0.0
      %v388 = vmax.f32 %v132, 0.0
      %v389 = vmax.f32 %v133, 0.0
      %v390 = vmax.f32 %v134, 0.0
      %v391 = vmax.f32 %v135, 0.0
      %v392 = vmax.f32 %v136, 0.0
      %v393 = vmax.f32 %v137, 0.0
      %v394 = vmax.f32 %v138, 0.0
      %v395 = vmax.f32 %v139, 0.0
      %v396 = vmax.f32 %v140, 0.0
      %v397 = vmax.f32 %v141, 0.0
      %v398 = vmax.f32 %v142, 0.0
      %v399 = vmax.f32 %v143, 0.0
      %v400 = vmax.f32 %v144, 0.0
      %v401 = vmax.f32 %v145, 0.0
      %v402 = vmax.f32 %v146, 0.0
      %v403 = vmax.f32 %v147, 0.0
      %v404 = vmax.f32 %v148, 0.0
      %v405 = vmax.f32 %v149, 0.0
      %v406 = vmax.f32 %v150, 0.0
      %v407 = vmax.f32 %v151, 0.0
      %v408 = vmax.f32 %v152, 0.0
      %v409 = vmax.f32 %v153, 0.0
      %v410 = vmax.f32 %v154, 0.0
      %v411 = vmax.f32 %v155, 0.0
      %v412 = vmax.f32 %v156, 0.0
      %v413 = vmax.f32 %v157, 0.0
      %v414 = vmax.f32 %v158, 0.0
      %v415 = vmax.f32 %v159, 0.0
      %v416 = vmax.f32 %v160, 0.0
      %v417 = vmax.f32 %v161, 0.0
      %v418 = vmax.f32 %v162, 0.0
      %v419 = vmax.f32 %v163, 0.0
      %v420 = vmax.f32 %v164, 0.0
      %v421 = vmax.f32 %v165, 0.0
      %v422 = vmax.f32 %v166, 0.0
      %v423 = vmax.f32 %v167, 0.0
      %v424 = vmax.f32 %v168, 0.0
      %v425 = vmax.f32 %v169, 0.0
      %v426 = vmax.f32 %v170, 0.0
      %v427 = vmax.f32 %v171, 0.0
      %v428 = vmax.f32 %v172, 0.0
      %v429 = vmax.f32 %v173, 0.0
      %v430 = vmax.f32 %v174, 0.0
      %v431 = vmax.f32 %v175, 0.0
      %v432 = vmax.f32 %v176, 0.0
      %v433 = vmax.f32 %v177, 0.0
      %v434 = vmax.f32 %v178, 0.0
      %v435 = vmax.f32 %v179, 0.0
      %v436 = vmax.f32 %v180, 0.0
      %v437 = vmax.f32 %v181, 0.0
      %v438 = vmax.f32 %v182, 0.0
      %v439 = vmax.f32 %v183, 0.0
      %v440 = vmax.f32 %v184, 0.0
      %v441 = vmax.f32 %v185, 0.0
      %v442 = vmax.f32 %v186, 0.0
      %v443 = vmax.f32 %v187, 0.0
      %v444 = vmax.f32 %v188, 0.0
      %v445 = vmax.f32 %v189, 0.0
      %v446 = vmax.f32 %v190, 0.0
      %v447 = vmax.f32 %v191, 0.0
      %v448 = vmax.f32 %v192, 0.0
      %v449 = vmax.f32 %v193, 0.0
      %v450 = vmax.f32 %v194, 0.0
      %v451 = vmax.f32 %v195, 0.0
      %v452 = vmax.f32 %v196, 0.0
      %v453 = vmax.f32 %v197, 0.0
      %v454 = vmax.f32 %v198, 0.0
      %v455 = vmax.f32 %v199, 0.0
      %v456 = vmax.f32 %v200, 0.0
      %v457 = vmax.f32 %v201, 0.0
      %v458 = vmax.f32 %v202, 0.0
      %v459 = vmax.f32 %v203, 0.0
      %v460 = vmax.f32 %v204, 0.0
      %v461 = vmax.f32 %v205, 0.0
      %v462 = vmax.f32 %v206, 0.0
      %v463 = vmax.f32 %v207, 0.0
      %v464 = vmax.f32 %v208, 0.0
      %v465 = vmax.f32 %v209, 0.0
      %v466 = vmax.f32 %v210, 0.0
      %v467 = vmax.f32 %v211, 0.0
      %v468 = vmax.f32 %v212, 0.0
      %v469 = vmax.f32 %v213, 0.0
      %v470 = vmax.f32 %v214, 0.0
      %v471 = vmax.f32 %v215, 0.0
      %v472 = vmax.f32 %v216, 0.0
      %v473 = vmax.f32 %v217, 0.0
      %v474 = vmax.f32 %v218, 0.0
      %v475 = vmax.f32 %v219, 0.0
      %v476 = vmax.f32 %v220, 0.0
      %v477 = vmax.f32 %v221, 0.0
      %v478 = vmax.f32 %v222, 0.0
      %v479 = vmax.f32 %v223, 0.0
      %v480 = vmax.f32 %v224, 0.0
      %v481 = vmax.f32 %v225, 0.0
      %v482 = vmax.f32 %v226, 0.0
      %v483 = vmax.f32 %v227, 0.0
      %v484 = vmax.f32 %v228, 0.0
      %v485 = vmax.f32 %v229, 0.0
      %v486 = vmax.f32 %v230, 0.0
      %v487 = vmax.f32 %v231, 0.0
      %v488 = vmax.f32 %v232, 0.0
      %v489 = vmax.f32 %v233, 0.0
      %v490 = vmax.f32 %v234, 0.0
      %v491 = vmax.f32 %v235, 0.0
      %v492 = vmax.f32 %v236, 0.0
      %v493 = vmax.f32 %v237, 0.0
      %v494 = vmax.f32 %v238, 0.0
      %v495 = vmax.f32 %v239, 0.0
      %v496 = vmax.f32 %v240, 0.0
      %v497 = vmax.f32 %v241, 0.0
      %v498 = vmax.f32 %v242, 0.0
      %v499 = vmax.f32 %v243, 0.0
      %v500 = vmax.f32 %v244, 0.0
      %v501 = vmax.f32 %v245, 0.0
      %v502 = vmax.f32 %v246, 0.0
      %v503 = vmax.f32 %v247, 0.0
      %v504 = vmax.f32 %v248, 0.0
      %v505 = vmax.f32 %v249, 0.0
      %v506 = vmax.f32 %v250, 0.0
      %v507 = vmax.f32 %v251, 0.0
      %v508 = vmax.f32 %v252, 0.0
      %v509 = vmax.f32 %v253, 0.0
      %v510 = vmax.f32 %v254, 0.0
      %v511 = vmax.f32 %v255, 0.0
      %v512 = vmax.f32 %v256, 0.0
      %v513 = vmax.f32 %v257, 0.0
      %v514 = vmax.f32 %v258, 0.0
      %v515 = vmax.f32 %v259, 0.0
      %v516 = vmax.f32 %v260, 0.0
      %v517 = vmax.f32 %v261, 0.0
      %v518 = vmax.f32 %v262, 0.0
      %v519 = vmax.f32 %v263, 0.0
      %v520 = vmax.f32 %v264, 0.0
      %v521 = vmax.f32 %v265, 0.0
      %v522 = vmax.f32 %v266, 0.0
      %v523 = vmax.f32 %v267, 0.0
      %v524 = vmax.f32 %v268, 0.0
      %v525 = vmax.f32 %v269, 0.0
      %v526 = vmax.f32 %v270, 0.0
      %v527 = vmax.f32 %v271, 0.0
      %v528 = vmax.f32 %v272, 0.0
      %v529 = vmax.f32 %v273, 0.0
      %v530 = vmax.f32 %v274, 0.0
      %v531 = vmax.f32 %v275, 0.0
      %v532 = vmax.f32 %v276, 0.0
      %v533 = vmax.f32 %v277, 0.0
      %v534 = vmax.f32 %v278, 0.0
      %v535 = vmax.f32 %v279, 0.0
      %v536 = vmax.f32 %v280, 0.0
      %v537 = vmax.f32 %v281, 0.0
      %v538 = vmax.f32 %v282, 0.0
      %v539 = vmax.f32 %v283, 0.0
      %v540 = vmax.f32 %v284, 0.0
      %v541 = vmax.f32 %v285, 0.0
      %v542 = vmax.f32 %v286, 0.0
      %v543 = vmax.f32 %v287, 0.0
      %v544 = vmax.f32 %v288, 0.0
      %v545 = vmax.f32 %v289, 0.0
      %v546 = vmax.f32 %v290, 0.0
      %v547 = vmax.f32 %v291, 0.0
      %v548 = vmax.f32 %v292, 0.0
      %v549 = vmax.f32 %v293, 0.0
      %v550 = vmax.f32 %v294, 0.0
      %v551 = vmax.f32 %v295, 0.0
      %v552 = vmax.f32 %v296, 0.0
      %v553 = vmax.f32 %v297, 0.0
      %v554 = vmax.f32 %v298, 0.0
      %v555 = vmax.f32 %v299, 0.0
      %v556 = vmax.f32 %v300, 0.0
      %v557 = vmax.f32 %v301, 0.0
      %v558 = vmax.f32 %v302, 0.0
      %v559 = vmax.f32 %v303, 0.0
      %v560 = vmax.f32 %v304, 0.0
      %v561 = vmax.f32 %v305, 0.0
      %v562 = vmax.f32 %v306, 0.0
      %v563 = vmax.f32 %v307, 0.0
      %v564 = vmax.f32 %v308, 0.0
      %v565 = vmax.f32 %v309, 0.0
      %v566 = vmax.f32 %v310, 0.0
      %v567 = vmax.f32 %v311, 0.0
      %v568 = vmax.f32 %v312, 0.0
      %v569 = vmax.f32 %v313, 0.0
      %v570 = vmax.f32 %v314, 0.0
      %v571 = vmax.f32 %v315, 0.0
      %v572 = vmax.f32 %v316, 0.0
      %v573 = vmax.f32 %v317, 0.0
      %v574 = vmax.f32 %v318, 0.0
      %v575 = vmax.f32 %v319, 0.0
      %v576 = vmax.f32 %v320, 0.0
      %v577 = vmax.f32 %v321, 0.0
      %v578 = vmax.f32 %v322, 0.0
      %v579 = vmax.f32 %v323, 0.0
      %v580 = vmax.f32 %v324, 0.0
      %v581 = vmax.f32 %v325, 0.0
      %v582 = vmax.f32 %v326, 0.0
      %v583 = vmax.f32 %v327, 0.0
      %v584 = vmax.f32 %v328, 0.0
      %v585 = vmax.f32 %v329, 0.0
      %v586 = vmax.f32 %v330, 0.0
      %v587 = vmax.f32 %v331, 0.0
      %v588 = vmax.f32 %v332, 0.0
      %v589 = vmax.f32 %v333, 0.0
      %v590 = vmax.f32 %v334, 0.0
      %v591 = vmax.f32 %v335, 0.0
      %v592 = vmax.f32 %v336, 0.0
      %v593 = vmax.f32 %v337, 0.0
      %v594 = vmax.f32 %v338, 0.0
      %v595 = vmax.f32 %v339, 0.0
      %v596 = vmax.f32 %v340, 0.0
      %v597 = vmax.f32 %v341, 0.0
      %v598 = vmax.f32 %v342, 0.0
      %v599 = vmax.f32 %v343, 0.0
      %v600 = vmax.f32 %v344, 0.0
      %v601 = vmax.f32 %v345, 0.0
      %v602 = vmax.f32 %v346, 0.0
      %v603 = vmax.f32 %v347, 0.0
      %v604 = vmax.f32 %v348, 0.0
      %v605 = vmax.f32 %v349, 0.0
      %v606 = vmax.f32 %v350, 0.0
      %v607 = vmax.f32 %v351, 0.0
      %v608 = vmax.f32 %v352, 0.0
      %v609 = vmax.f32 %v353, 0.0
      %v610 = vmax.f32 %v354, 0.0
      %v611 = vmax.f32 %v355, 0.0
      %v612 = vmax.f32 %v356, 0.0
      %v613 = vmax.f32 %v357, 0.0
      %v614 = vmax.f32 %v358, 0.0
      %v615 = vmax.f32 %v359, 0.0
      %v616 = vmax.f32 %v360, 0.0
      %v617 = vmax.f32 %v361, 0.0
      %v618 = vmax.f32 %v362, 0.0
      %v619 = vmax.f32 %v363, 0.0
      %v620 = vmax.f32 %v364, 0.0
      %v621 = vmax.f32 %v365, 0.0
      %v622 = vmax.f32 %v366, 0.0
      %v623 = vmax.f32 %v367, 0.0
      %v624 = vmax.f32 %v368, 0.0
      %v625 = vmax.f32 %v369, 0.0
      %v626 = vmax.f32 %v370, 0.0
      %v627 = vmax.f32 %v371, 0.0
      %v628 = vmax.f32 %v372, 0.0
      %v629 = vmax.f32 %v373, 0.0
      %v630 = vmax.f32 %v374, 0.0
      %v631 = vmax.f32 %v375, 0.0
      %632 = vst [vmem:[%s118] sm:$0xff] %v376
      %633 = vst [vmem:[%s118 + $0x8] sm:$0xff] %v377
      %634 = vst [vmem:[%s118 + $0x10] sm:$0xff] %v378
      %635 = vst [vmem:[%s118 + $0x18] sm:$0xff] %v379
      %636 = vst [vmem:[%s118 + $0x20] sm:$0xff] %v380
      %637 = vst [vmem:[%s118 + $0x28] sm:$0xff] %v381
      %638 = vst [vmem:[%s118 + $0x30] sm:$0xff] %v382
      %639 = vst [vmem:[%s118 + $0x38] sm:$0xff] %v383
      %640 = vst [vmem:[%s118 + $0x40] sm:$0xff] %v384
      %641 = vst [vmem:[%s118 + $0x48] sm:$0xff] %v385
      %642 = vst [vmem:[%s118 + $0x50] sm:$0xff] %v386
      %643 = vst [vmem:[%s118 + $0x58] sm:$0xff] %v387
      %644 = vst [vmem:[%s118 + $0x60] sm:$0xff] %v388
      %645 = vst [vmem:[%s118 + $0x68] sm:$0xff] %v389
      %646 = vst [vmem:[%s118 + $0x70] sm:$0xff] %v390
      %647 = vst [vmem:[%s118 + $0x78] sm:$0xff] %v391
      %648 = vst [vmem:[%s118 + $0x80] sm:$0xff] %v392
      %649 = vst [vmem:[%s118 + $0x88] sm:$0xff] %v393
      %650 = vst [vmem:[%s118 + $0x90] sm:$0xff] %v394
      %651 = vst [vmem:[%s118 + $0x98] sm:$0xff] %v395
      %652 = vst [vmem:[%s118 + $0xa0] sm:$0xff] %v396
      %653 = vst [vmem:[%s118 + $0xa8] sm:$0xff] %v397
      %654 = vst [vmem:[%s118 + $0xb0] sm:$0xff] %v398
      %655 = vst [vmem:[%s118 + $0xb8] sm:$0xff] %v399
      %656 = vst [vmem:[%s118 + $0xc0] sm:$0xff] %v400
      %657 = vst [vmem:[%s118 + $0xc8] sm:$0xff] %v401
      %658 = vst [vmem:[%s118 + $0xd0] sm:$0xff] %v402
      %659 = vst [vmem:[%s118 + $0xd8] sm:$0xff] %v403
      %660 = vst [vmem:[%s118 + $0xe0] sm:$0xff] %v404
      %661 = vst [vmem:[%s118 + $0xe8] sm:$0xff] %v405
      %662 = vst [vmem:[%s118 + $0xf0] sm:$0xff] %v406
      %663 = vst [vmem:[%s118 + $0xf8] sm:$0xff] %v407
      %664 = vst [vmem:[%s118 + $0x100] sm:$0xff] %v408
      %665 = vst [vmem:[%s118 + $0x108] sm:$0xff] %v409
      %666 = vst [vmem:[%s118 + $0x110] sm:$0xff] %v410
      %667 = vst [vmem:[%s118 + $0x118] sm:$0xff] %v411
      %668 = vst [vmem:[%s118 + $0x120] sm:$0xff] %v412
      %669 = vst [vmem:[%s118 + $0x128] sm:$0xff] %v413
      %670 = vst [vmem:[%s118 + $0x130] sm:$0xff] %v414
      %671 = vst [vmem:[%s118 + $0x138] sm:$0xff] %v415
      %672 = vst [vmem:[%s118 + $0x140] sm:$0xff] %v416
      %673 = vst [vmem:[%s118 + $0x148] sm:$0xff] %v417
      %674 = vst [vmem:[%s118 + $0x150] sm:$0xff] %v418
      %675 = vst [vmem:[%s118 + $0x158] sm:$0xff] %v419
      %676 = vst [vmem:[%s118 + $0x160] sm:$0xff] %v420
      %677 = vst [vmem:[%s118 + $0x168] sm:$0xff] %v421
      %678 = vst [vmem:[%s118 + $0x170] sm:$0xff] %v422
      %679 = vst [vmem:[%s118 + $0x178] sm:$0xff] %v423
      %680 = vst [vmem:[%s118 + $0x180] sm:$0xff] %v424
      %681 = vst [vmem:[%s118 + $0x188] sm:$0xff] %v425
      %682 = vst [vmem:[%s118 + $0x190] sm:$0xff] %v426
      %683 = vst [vmem:[%s118 + $0x198] sm:$0xff] %v427
      %684 = vst [vmem:[%s118 + $0x1a0] sm:$0xff] %v428
      %685 = vst [vmem:[%s118 + $0x1a8] sm:$0xff] %v429
      %686 = vst [vmem:[%s118 + $0x1b0] sm:$0xff] %v430
      %687 = vst [vmem:[%s118 + $0x1b8] sm:$0xff] %v431
      %688 = vst [vmem:[%s118 + $0x1c0] sm:$0xff] %v432
      %689 = vst [vmem:[%s118 + $0x1c8] sm:$0xff] %v433
      %690 = vst [vmem:[%s118 + $0x1d0] sm:$0xff] %v434
      %691 = vst [vmem:[%s118 + $0x1d8] sm:$0xff] %v435
      %692 = vst [vmem:[%s118 + $0x1e0] sm:$0xff] %v436
      %693 = vst [vmem:[%s118 + $0x1e8] sm:$0xff] %v437
      %694 = vst [vmem:[%s118 + $0x1f0] sm:$0xff] %v438
      %695 = vst [vmem:[%s118 + $0x1f8] sm:$0xff] %v439
      %696 = vst [vmem:[%s118 + $0x200] sm:$0xff] %v440
      %697 = vst [vmem:[%s118 + $0x208] sm:$0xff] %v441
      %698 = vst [vmem:[%s118 + $0x210] sm:$0xff] %v442
      %699 = vst [vmem:[%s118 + $0x218] sm:$0xff] %v443
      %700 = vst [vmem:[%s118 + $0x220] sm:$0xff] %v444
      %701 = vst [vmem:[%s118 + $0x228] sm:$0xff] %v445
      %702 = vst [vmem:[%s118 + $0x230] sm:$0xff] %v446
      %703 = vst [vmem:[%s118 + $0x238] sm:$0xff] %v447
      %704 = vst [vmem:[%s118 + $0x240] sm:$0xff] %v448
      %705 = vst [vmem:[%s118 + $0x248] sm:$0xff] %v449
      %706 = vst [vmem:[%s118 + $0x250] sm:$0xff] %v450
      %707 = vst [vmem:[%s118 + $0x258] sm:$0xff] %v451
      %708 = vst [vmem:[%s118 + $0x260] sm:$0xff] %v452
      %709 = vst [vmem:[%s118 + $0x268] sm:$0xff] %v453
      %710 = vst [vmem:[%s118 + $0x270] sm:$0xff] %v454
      %711 = vst [vmem:[%s118 + $0x278] sm:$0xff] %v455
      %712 = vst [vmem:[%s118 + $0x280] sm:$0xff] %v456
      %713 = vst [vmem:[%s118 + $0x288] sm:$0xff] %v457
      %714 = vst [vmem:[%s118 + $0x290] sm:$0xff] %v458
      %715 = vst [vmem:[%s118 + $0x298] sm:$0xff] %v459
      %716 = vst [vmem:[%s118 + $0x2a0] sm:$0xff] %v460
      %717 = vst [vmem:[%s118 + $0x2a8] sm:$0xff] %v461
      %718 = vst [vmem:[%s118 + $0x2b0] sm:$0xff] %v462
      %719 = vst [vmem:[%s118 + $0x2b8] sm:$0xff] %v463
      %720 = vst [vmem:[%s118 + $0x2c0] sm:$0xff] %v464
      %721 = vst [vmem:[%s118 + $0x2c8] sm:$0xff] %v465
      %722 = vst [vmem:[%s118 + $0x2d0] sm:$0xff] %v466
      %723 = vst [vmem:[%s118 + $0x2d8] sm:$0xff] %v467
      %724 = vst [vmem:[%s118 + $0x2e0] sm:$0xff] %v468
      %725 = vst [vmem:[%s118 + $0x2e8] sm:$0xff] %v469
      %726 = vst [vmem:[%s118 + $0x2f0] sm:$0xff] %v470
      %727 = vst [vmem:[%s118 + $0x2f8] sm:$0xff] %v471
      %728 = vst [vmem:[%s118 + $0x300] sm:$0xff] %v472
      %729 = vst [vmem:[%s118 + $0x308] sm:$0xff] %v473
      %730 = vst [vmem:[%s118 + $0x310] sm:$0xff] %v474
      %731 = vst [vmem:[%s118 + $0x318] sm:$0xff] %v475
      %732 = vst [vmem:[%s118 + $0x320] sm:$0xff] %v476
      %733 = vst [vmem:[%s118 + $0x328] sm:$0xff] %v477
      %734 = vst [vmem:[%s118 + $0x330] sm:$0xff] %v478
      %735 = vst [vmem:[%s118 + $0x338] sm:$0xff] %v479
      %736 = vst [vmem:[%s118 + $0x340] sm:$0xff] %v480
      %737 = vst [vmem:[%s118 + $0x348] sm:$0xff] %v481
      %738 = vst [vmem:[%s118 + $0x350] sm:$0xff] %v482
      %739 = vst [vmem:[%s118 + $0x358] sm:$0xff] %v483
      %740 = vst [vmem:[%s118 + $0x360] sm:$0xff] %v484
      %741 = vst [vmem:[%s118 + $0x368] sm:$0xff] %v485
      %742 = vst [vmem:[%s118 + $0x370] sm:$0xff] %v486
      %743 = vst [vmem:[%s118 + $0x378] sm:$0xff] %v487
      %744 = vst [vmem:[%s118 + $0x380] sm:$0xff] %v488
      %745 = vst [vmem:[%s118 + $0x388] sm:$0xff] %v489
      %746 = vst [vmem:[%s118 + $0x390] sm:$0xff] %v490
      %747 = vst [vmem:[%s118 + $0x398] sm:$0xff] %v491
      %748 = vst [vmem:[%s118 + $0x3a0] sm:$0xff] %v492
      %749 = vst [vmem:[%s118 + $0x3a8] sm:$0xff] %v493
      %750 = vst [vmem:[%s118 + $0x3b0] sm:$0xff] %v494
      %751 = vst [vmem:[%s118 + $0x3b8] sm:$0xff] %v495
      %752 = vst [vmem:[%s118 + $0x3c0] sm:$0xff] %v496
      %753 = vst [vmem:[%s118 + $0x3c8] sm:$0xff] %v497
      %754 = vst [vmem:[%s118 + $0x3d0] sm:$0xff] %v498
      %755 = vst [vmem:[%s118 + $0x3d8] sm:$0xff] %v499
      %756 = vst [vmem:[%s118 + $0x3e0] sm:$0xff] %v500
      %757 = vst [vmem:[%s118 + $0x3e8] sm:$0xff] %v501
      %758 = vst [vmem:[%s118 + $0x3f0] sm:$0xff] %v502
      %759 = vst [vmem:[%s118 + $0x3f8] sm:$0xff] %v503
      %760 = vst [vmem:[%s118 + $0x400] sm:$0xff] %v504
      %761 = vst [vmem:[%s118 + $0x408] sm:$0xff] %v505
      %762 = vst [vmem:[%s118 + $0x410] sm:$0xff] %v506
      %763 = vst [vmem:[%s118 + $0x418] sm:$0xff] %v507
      %764 = vst [vmem:[%s118 + $0x420] sm:$0xff] %v508
      %765 = vst [vmem:[%s118 + $0x428] sm:$0xff] %v509
      %766 = vst [vmem:[%s118 + $0x430] sm:$0xff] %v510
      %767 = vst [vmem:[%s118 + $0x438] sm:$0xff] %v511
      %768 = vst [vmem:[%s118 + $0x440] sm:$0xff] %v512
      %769 = vst [vmem:[%s118 + $0x448] sm:$0xff] %v513
      %770 = vst [vmem:[%s118 + $0x450] sm:$0xff] %v514
      %771 = vst [vmem:[%s118 + $0x458] sm:$0xff] %v515
      %772 = vst [vmem:[%s118 + $0x460] sm:$0xff] %v516
      %773 = vst [vmem:[%s118 + $0x468] sm:$0xff] %v517
      %774 = vst [vmem:[%s118 + $0x470] sm:$0xff] %v518
      %775 = vst [vmem:[%s118 + $0x478] sm:$0xff] %v519
      %776 = vst [vmem:[%s118 + $0x480] sm:$0xff] %v520
      %777 = vst [vmem:[%s118 + $0x488] sm:$0xff] %v521
      %778 = vst [vmem:[%s118 + $0x490] sm:$0xff] %v522
      %779 = vst [vmem:[%s118 + $0x498] sm:$0xff] %v523
      %780 = vst [vmem:[%s118 + $0x4a0] sm:$0xff] %v524
      %781 = vst [vmem:[%s118 + $0x4a8] sm:$0xff] %v525
      %782 = vst [vmem:[%s118 + $0x4b0] sm:$0xff] %v526
      %783 = vst [vmem:[%s118 + $0x4b8] sm:$0xff] %v527
      %784 = vst [vmem:[%s118 + $0x4c0] sm:$0xff] %v528
      %785 = vst [vmem:[%s118 + $0x4c8] sm:$0xff] %v529
      %786 = vst [vmem:[%s118 + $0x4d0] sm:$0xff] %v530
      %787 = vst [vmem:[%s118 + $0x4d8] sm:$0xff] %v531
      %788 = vst [vmem:[%s118 + $0x4e0] sm:$0xff] %v532
      %789 = vst [vmem:[%s118 + $0x4e8] sm:$0xff] %v533
      %790 = vst [vmem:[%s118 + $0x4f0] sm:$0xff] %v534
      %791 = vst [vmem:[%s118 + $0x4f8] sm:$0xff] %v535
      %792 = vst [vmem:[%s118 + $0x500] sm:$0xff] %v536
      %793 = vst [vmem:[%s118 + $0x508] sm:$0xff] %v537
      %794 = vst [vmem:[%s118 + $0x510] sm:$0xff] %v538
      %795 = vst [vmem:[%s118 + $0x518] sm:$0xff] %v539
      %796 = vst [vmem:[%s118 + $0x520] sm:$0xff] %v540
      %797 = vst [vmem:[%s118 + $0x528] sm:$0xff] %v541
      %798 = vst [vmem:[%s118 + $0x530] sm:$0xff] %v542
      %799 = vst [vmem:[%s118 + $0x538] sm:$0xff] %v543
      %800 = vst [vmem:[%s118 + $0x540] sm:$0xff] %v544
      %801 = vst [vmem:[%s118 + $0x548] sm:$0xff] %v545
      %802 = vst [vmem:[%s118 + $0x550] sm:$0xff] %v546
      %803 = vst [vmem:[%s118 + $0x558] sm:$0xff] %v547
      %804 = vst [vmem:[%s118 + $0x560] sm:$0xff] %v548
      %805 = vst [vmem:[%s118 + $0x568] sm:$0xff] %v549
      %806 = vst [vmem:[%s118 + $0x570] sm:$0xff] %v550
      %807 = vst [vmem:[%s118 + $0x578] sm:$0xff] %v551
      %808 = vst [vmem:[%s118 + $0x580] sm:$0xff] %v552
      %809 = vst [vmem:[%s118 + $0x588] sm:$0xff] %v553
      %810 = vst [vmem:[%s118 + $0x590] sm:$0xff] %v554
      %811 = vst [vmem:[%s118 + $0x598] sm:$0xff] %v555
      %812 = vst [vmem:[%s118 + $0x5a0] sm:$0xff] %v556
      %813 = vst [vmem:[%s118 + $0x5a8] sm:$0xff] %v557
      %814 = vst [vmem:[%s118 + $0x5b0] sm:$0xff] %v558
      %815 = vst [vmem:[%s118 + $0x5b8] sm:$0xff] %v559
      %816 = vst [vmem:[%s118 + $0x5c0] sm:$0xff] %v560
      %817 = vst [vmem:[%s118 + $0x5c8] sm:$0xff] %v561
      %818 = vst [vmem:[%s118 + $0x5d0] sm:$0xff] %v562
      %819 = vst [vmem:[%s118 + $0x5d8] sm:$0xff] %v563
      %820 = vst [vmem:[%s118 + $0x5e0] sm:$0xff] %v564
      %821 = vst [vmem:[%s118 + $0x5e8] sm:$0xff] %v565
      %822 = vst [vmem:[%s118 + $0x5f0] sm:$0xff] %v566
      %823 = vst [vmem:[%s118 + $0x5f8] sm:$0xff] %v567
      %824 = vst [vmem:[%s118 + $0x600] sm:$0xff] %v568
      %825 = vst [vmem:[%s118 + $0x608] sm:$0xff] %v569
      %826 = vst [vmem:[%s118 + $0x610] sm:$0xff] %v570
      %827 = vst [vmem:[%s118 + $0x618] sm:$0xff] %v571
      %828 = vst [vmem:[%s118 + $0x620] sm:$0xff] %v572
      %829 = vst [vmem:[%s118 + $0x628] sm:$0xff] %v573
      %830 = vst [vmem:[%s118 + $0x630] sm:$0xff] %v574
      %831 = vst [vmem:[%s118 + $0x638] sm:$0xff] %v575
      %832 = vst [vmem:[%s118 + $0x640] sm:$0xff] %v576
      %833 = vst [vmem:[%s118 + $0x648] sm:$0xff] %v577
      %834 = vst [vmem:[%s118 + $0x650] sm:$0xff] %v578
      %835 = vst [vmem:[%s118 + $0x658] sm:$0xff] %v579
      %836 = vst [vmem:[%s118 + $0x660] sm:$0xff] %v580
      %837 = vst [vmem:[%s118 + $0x668] sm:$0xff] %v581
      %838 = vst [vmem:[%s118 + $0x670] sm:$0xff] %v582
      %839 = vst [vmem:[%s118 + $0x678] sm:$0xff] %v583
      %840 = vst [vmem:[%s118 + $0x680] sm:$0xff] %v584
      %841 = vst [vmem:[%s118 + $0x688] sm:$0xff] %v585
      %842 = vst [vmem:[%s118 + $0x690] sm:$0xff] %v586
      %843 = vst [vmem:[%s118 + $0x698] sm:$0xff] %v587
      %844 = vst [vmem:[%s118 + $0x6a0] sm:$0xff] %v588
      %845 = vst [vmem:[%s118 + $0x6a8] sm:$0xff] %v589
      %846 = vst [vmem:[%s118 + $0x6b0] sm:$0xff] %v590
      %847 = vst [vmem:[%s118 + $0x6b8] sm:$0xff] %v591
      %848 = vst [vmem:[%s118 + $0x6c0] sm:$0xff] %v592
      %849 = vst [vmem:[%s118 + $0x6c8] sm:$0xff] %v593
      %850 = vst [vmem:[%s118 + $0x6d0] sm:$0xff] %v594
      %851 = vst [vmem:[%s118 + $0x6d8] sm:$0xff] %v595
      %852 = vst [vmem:[%s118 + $0x6e0] sm:$0xff] %v596
      %853 = vst [vmem:[%s118 + $0x6e8] sm:$0xff] %v597
      %854 = vst [vmem:[%s118 + $0x6f0] sm:$0xff] %v598
      %855 = vst [vmem:[%s118 + $0x6f8] sm:$0xff] %v599
      %856 = vst [vmem:[%s118 + $0x700] sm:$0xff] %v600
      %857 = vst [vmem:[%s118 + $0x708] sm:$0xff] %v601
      %858 = vst [vmem:[%s118 + $0x710] sm:$0xff] %v602
      %859 = vst [vmem:[%s118 + $0x718] sm:$0xff] %v603
      %860 = vst [vmem:[%s118 + $0x720] sm:$0xff] %v604
      %861 = vst [vmem:[%s118 + $0x728] sm:$0xff] %v605
      %862 = vst [vmem:[%s118 + $0x730] sm:$0xff] %v606
      %863 = vst [vmem:[%s118 + $0x738] sm:$0xff] %v607
      %864 = vst [vmem:[%s118 + $0x740] sm:$0xff] %v608
      %865 = vst [vmem:[%s118 + $0x748] sm:$0xff] %v609
      %866 = vst [vmem:[%s118 + $0x750] sm:$0xff] %v610
      %867 = vst [vmem:[%s118 + $0x758] sm:$0xff] %v611
      %868 = vst [vmem:[%s118 + $0x760] sm:$0xff] %v612
      %869 = vst [vmem:[%s118 + $0x768] sm:$0xff] %v613
      %870 = vst [vmem:[%s118 + $0x770] sm:$0xff] %v614
      %871 = vst [vmem:[%s118 + $0x778] sm:$0xff] %v615
      %872 = vst [vmem:[%s118 + $0x780] sm:$0xff] %v616
      %873 = vst [vmem:[%s118 + $0x788] sm:$0xff] %v617
      %874 = vst [vmem:[%s118 + $0x790] sm:$0xff] %v618
      %875 = vst [vmem:[%s118 + $0x798] sm:$0xff] %v619
      %876 = vst [vmem:[%s118 + $0x7a0] sm:$0xff] %v620
      %877 = vst [vmem:[%s118 + $0x7a8] sm:$0xff] %v621
      %878 = vst [vmem:[%s118 + $0x7b0] sm:$0xff] %v622
      %879 = vst [vmem:[%s118 + $0x7b8] sm:$0xff] %v623
      %880 = vst [vmem:[%s118 + $0x7c0] sm:$0xff] %v624
      %881 = vst [vmem:[%s118 + $0x7c8] sm:$0xff] %v625
      %882 = vst [vmem:[%s118 + $0x7d0] sm:$0xff] %v626
      %883 = vst [vmem:[%s118 + $0x7d8] sm:$0xff] %v627
      %884 = vst [vmem:[%s118 + $0x7e0] sm:$0xff] %v628
      %885 = vst [vmem:[%s118 + $0x7e8] sm:$0xff] %v629
      %886 = vst [vmem:[%s118 + $0x7f0] sm:$0xff] %v630
      %887 = vst [vmem:[%s118 + $0x7f8] sm:$0xff] %v631
      %s888 = smul.u32 256, %s12
      %p889 = scmp.lt.s32.totalorder %s888, 511
      %s890 = scalar_select %p889, %s888, 511
      %s891 = smul.addr %s890, 8
      %s892 = scalar_lea.vmem %s1, %s891
      // Predicated region
      $region25: #{_relu_pallas.1} parent=23 // pred_check
        %p893 = pneg %p56
      $region26: #{_relu_pallas.1} parent=23 // pred_check_branch
        %895 = sbr.rel (%p893) target = $region28
      $region27: #{_relu_pallas.1} parent=23 // pred_region
        %s896 = smul.u32 256, %s12
      $region28: #{_relu_pallas.1} parent=23 // pred_fallthru
        _
    $region24: #{_relu_pallas.1} parent=5 // pred_fallthru
      _
    %p897 = scmp.le.s32.totalorder 2, %s7
    // Predicated region
    $region29: #{_relu_pallas.1} parent=5 // pred_check
      %p898 = pneg %p897
    $region30: #{_relu_pallas.1} parent=5 // pred_check_branch
      %900 = sbr.rel (%p898) target = $region32
    $region31: #{_relu_pallas.1} parent=5 // pred_region
      %s901 = ssub.s32 %s7, 2
      // Predicated region
      $region33: #{_relu_pallas.1} parent=31 // pred_check
        %p902 = pneg %p62
      $region34: #{_relu_pallas.1} parent=31 // pred_check_branch
        %904 = sbr.rel (%p902) target = $region36
      $region35: #{_relu_pallas.1} parent=31 // pred_region
        %s905 = smul.u32 256, %s13
        %p906 = scmp.lt.s32.totalorder %s905, 511
        %s907 = scalar_select %p906, %s905, 511
        %s908 = smul.addr %s907, 8
        %s909 = scalar_lea.vmem %s1, %s908
      $region36: #{_relu_pallas.1} parent=31 // pred_fallthru
        _
    $region32: #{_relu_pallas.1} parent=5 // pred_fallthru
      _
  $region6: #{_relu_pallas.1} parent=0 // loop_footer
    %s11 = sadd.s32 1, %s7
  $region7: #{_relu_pallas.1} parent=0 // loop_footer_branch
    %6 = sbr.rel target = $region3
  $region8: #{_relu_pallas.1} parent=0 // loop_exit
    _

</llo_original>
